<compile_context>
chip_gen: v6e
topology: v6e:2x2x1
jax: 0.10.0
libtpu: 0.0.40
codegen_flags: <defaults>
</compile_context>

<pallas_src>
import jax
import jax.numpy as jnp
from jax import lax
from jax.experimental import pallas as pl
from jax.experimental.pallas import tpu as pltpu

EPS = 1e-5
WIDTH = 128  # padded lane width for every layer


def _ae_layer_kernel(x_ref, w_ref, b_ref, g_ref, be_ref, out_ref, h_ref):
    """One grid step == one Linear(+ReLU+BN) layer. h_ref persists across steps."""
    l = pl.program_id(0)
    n_l = pl.num_programs(0)

    # Load the padded input into the persistent activation scratch on the first layer.
    @pl.when(l == 0)
    def _():
        h_ref[...] = x_ref[...].astype(jnp.float32)

    h = h_ref[...]                                   # (B, 128) f32
    w = w_ref[0]                                     # (128, 128) bf16
    b = b_ref[0]                                     # (1, 128) f32
    y = jnp.dot(h.astype(jnp.bfloat16), w,
                preferred_element_type=jnp.float32) + b

    # Hidden layers: ReLU + BatchNorm1d (training-mode batch stats), write back to scratch.
    @pl.when(l != n_l - 1)
    def _():
        hr = jnp.maximum(y, 0.0)
        inv_b = 1.0 / hr.shape[0]
        s = jnp.sum(hr, axis=0, keepdims=True)
        ss = jnp.sum(hr * hr, axis=0, keepdims=True)
        mean = s * inv_b
        var = jnp.maximum(ss * inv_b - mean * mean, 0.0)   # one-pass, clamp tiny negatives
        h_ref[...] = (hr - mean) * lax.rsqrt(var + EPS) * g_ref[0] + be_ref[0]

    # Final layer: plain Linear, store lane-dense (B,128) output.
    @pl.when(l == n_l - 1)
    def _():
        out_ref[...] = y.astype(out_ref.dtype)


def pack_params(params):
    """Pad each layer to 128x128 and stack: W (L,128,128) bf16; b/gamma/beta (L,1,128) f32."""
    n = len(params)
    Ws = jnp.zeros((n, WIDTH, WIDTH), jnp.float32)
    Bs = jnp.zeros((n, 1, WIDTH), jnp.float32)
    Gs = jnp.zeros((n, 1, WIDTH), jnp.float32)
    Es = jnp.zeros((n, 1, WIDTH), jnp.float32)
    for li, layer in enumerate(params):
        fi, fo = layer["w"].shape
        Ws = Ws.at[li, :fi, :fo].set(layer["w"])
        Bs = Bs.at[li, 0, :fo].set(layer["b"][0])
        if "gamma" in layer:
            Gs = Gs.at[li, 0, :fo].set(layer["gamma"][0])
            Es = Es.at[li, 0, :fo].set(layer["beta"][0])
    return Ws.astype(jnp.bfloat16), Bs, Gs, Es


def autoencoder_forward(x, params):
    """x: (B, input_dim) float32. params: list of per-layer dicts (see make_params)."""
    B, D = x.shape
    n_layers = len(params)
    Ws, Bs, Gs, Es = pack_params(params)

    # Lane-pad the input to 128 (extra lanes are zero; padded weight rows are zero too).
    x_pad = jnp.zeros((B, WIDTH), jnp.float32).at[:, :D].set(x)

    out_pad = pl.pallas_call(
        _ae_layer_kernel,
        out_shape=jax.ShapeDtypeStruct((B, WIDTH), jnp.float32),
        grid=(n_layers,),
        in_specs=[
            pl.BlockSpec((B, WIDTH), lambda l: (0, 0)),            # x (resident)
            pl.BlockSpec((1, WIDTH, WIDTH), lambda l: (l, 0, 0)),  # W[l]
            pl.BlockSpec((1, 1, WIDTH), lambda l: (l, 0, 0)),      # b[l]
            pl.BlockSpec((1, 1, WIDTH), lambda l: (l, 0, 0)),      # gamma[l]
            pl.BlockSpec((1, 1, WIDTH), lambda l: (l, 0, 0)),      # beta[l]
        ],
        out_specs=pl.BlockSpec((B, WIDTH), lambda l: (0, 0)),      # resident, written last step
        scratch_shapes=[pltpu.VMEM((B, WIDTH), jnp.float32)],      # persistent activation
        compiler_params=pltpu.CompilerParams(
            dimension_semantics=("arbitrary",)),                   # layer axis is sequential
    )(x_pad, Ws, Bs, Gs, Es)

    return out_pad[:, :D]


def make_params(key, input_dim):
    """Deterministic PyTorch-style init (U(-1/sqrt(fan_in), 1/sqrt(fan_in)))."""
    dims = [
        (input_dim, 128), (128, 128), (128, 128), (128, 128), (128, 8),   # encoder
        (8, 128), (128, 128), (128, 128), (128, 128), (128, input_dim),   # decoder
    ]
    params = []
    n_layers = len(dims)
    for li, (fan_in, fan_out) in enumerate(dims):
        key, kw, kb = jax.random.split(key, 3)
        bound = 1.0 / jnp.sqrt(float(fan_in))
        w = jax.random.uniform(kw, (fan_in, fan_out), jnp.float32, -bound, bound)
        b = jax.random.uniform(kb, (1, fan_out), jnp.float32, -bound, bound)
        layer = {"w": w, "b": b}
        if li != n_layers - 1:
            # BatchNorm1d affine defaults: weight=1, bias=0
            layer["gamma"] = jnp.ones((1, fan_out), jnp.float32)
            layer["beta"] = jnp.zeros((1, fan_out), jnp.float32)
        params.append(layer)
    return params


def reference_forward(x, params):
    """Pure-JAX reference (bf16 matmul operands, f32 accumulation / BN, like the kernel)."""
    h = x
    n_layers = len(params)
    for li, layer in enumerate(params):
        y = jnp.dot(h.astype(jnp.bfloat16), layer["w"].astype(jnp.bfloat16),
                    preferred_element_type=jnp.float32) + layer["b"]
        if li != n_layers - 1:
            hr = jnp.maximum(y, 0.0)
            mean = jnp.mean(hr, axis=0, keepdims=True)
            var = jnp.mean((hr - mean) ** 2, axis=0, keepdims=True)
            h = (hr - mean) * lax.rsqrt(var + EPS) * layer["gamma"] + layer["beta"]
        else:
            h = y
    return h


if __name__ == "__main__":
    input_dim = 32
    batch = 8

    key = jax.random.PRNGKey(0)
    key, kx = jax.random.split(key)
    x = jax.random.normal(kx, (batch, input_dim), jnp.float32)
    params = make_params(key, input_dim)

    out = autoencoder_forward(x, params)
    jax.block_until_ready(out)

    ref = reference_forward(x, params)
    assert out.shape == (batch, input_dim)
    assert jnp.allclose(out, ref, atol=2e-3, rtol=2e-3), "mismatch vs reference"
    print("KERNEL_OK")
</pallas_src>

<mosaic_0001>
module attributes {stable_mosaic.version = 11 : i64} {
  func.func @_ae_layer_kernel(%arg0: i32, %arg1: memref<8x128xf32, #tpu.memory_space<vmem>>, %arg2: memref<1x128x128xbf16, #tpu.memory_space<vmem>>, %arg3: memref<1x1x128xf32, #tpu.memory_space<vmem>>, %arg4: memref<1x1x128xf32, #tpu.memory_space<vmem>>, %arg5: memref<1x1x128xf32, #tpu.memory_space<vmem>>, %arg6: memref<8x128xf32, #tpu.memory_space<vmem>>, %arg7: memref<8x128xf32, #tpu.memory_space<vmem>>) attributes {dimension_semantics = [#tpu.dimension_semantics<arbitrary>], iteration_bounds = array<i64: 10>, scalar_prefetch = 0 : i64, scratch_operands = 1 : i64, tpu.core_type = #tpu.core_type<tc>, window_params = [{pipeline_mode = #tpu.pipeline_mode<synchronous>, transform_indices = @transform_0, window_bounds = array<i64: 8, 128>}, {transform_indices = @transform_1, window_bounds = array<i64: 1, 128, 128>}, {transform_indices = @transform_2, window_bounds = array<i64: 1, 1, 128>}, {transform_indices = @transform_3, window_bounds = array<i64: 1, 1, 128>}, {transform_indices = @transform_4, window_bounds = array<i64: 1, 1, 128>}, {pipeline_mode = #tpu.pipeline_mode<synchronous>, transform_indices = @transform_5, window_bounds = array<i64: 8, 128>}]} {
    %c0_i32 = arith.constant 0 : i32
    %0 = arith.cmpi eq, %arg0, %c0_i32 : i32
    %1 = arith.extui %0 : i1 to i32
    %c0_i32_0 = arith.constant 0 : i32
    %2 = arith.cmpi ne, %1, %c0_i32_0 : i32
    scf.if %2 {
      %c0_11 = arith.constant 0 : index
      %c0_12 = arith.constant 0 : index
      %18 = vector.load %arg1[%c0_11, %c0_12] : memref<8x128xf32, #tpu.memory_space<vmem>>, vector<8x128xf32>
      %c0_13 = arith.constant 0 : index
      %c0_14 = arith.constant 0 : index
      %19 = vector.load %arg7[%c0_13, %c0_14] : memref<8x128xf32, #tpu.memory_space<vmem>>, vector<8x128xf32>
      tpu.vector_store %arg7[%c0_13, %c0_14], %18 {strides = array<i32>} : memref<8x128xf32, #tpu.memory_space<vmem>>, vector<8x128xf32>,
    } else {
    }
    %c0 = arith.constant 0 : index
    %c0_1 = arith.constant 0 : index
    %3 = vector.load %arg7[%c0, %c0_1] : memref<8x128xf32, #tpu.memory_space<vmem>>, vector<8x128xf32>
    %c0_2 = arith.constant 0 : index
    %c0_3 = arith.constant 0 : index
    %c0_4 = arith.constant 0 : index
    %4 = vector.load %arg2[%c0_2, %c0_3, %c0_4] : memref<1x128x128xbf16, #tpu.memory_space<vmem>>, vector<1x128x128xbf16>
    %5 = vector.shape_cast %4 : vector<1x128x128xbf16> to vector<128x128xbf16>
    %c0_5 = arith.constant 0 : index
    %c0_6 = arith.constant 0 : index
    %c0_7 = arith.constant 0 : index
    %6 = vector.load %arg3[%c0_5, %c0_6, %c0_7] : memref<1x1x128xf32, #tpu.memory_space<vmem>>, vector<1x1x128xf32>
    %7 = vector.shape_cast %6 : vector<1x1x128xf32> to vector<1x128xf32>
    %8 = arith.truncf %3 : vector<8x128xf32> to vector<8x128xbf16>
    %cst = arith.constant dense<0.000000e+00> : vector<8x128xf32>
    %9 = tpu.matmul %8, %5, %cst {dimension_numbers = #tpu.dot_dimension_numbers<[1], [0], [0], [1], [0, 0, 1, 1], [], []>} : vector<8x128xbf16>, vector<128x128xbf16>, vector<8x128xf32> -> vector<8x128xf32>
    %10 = vector.broadcast %7 : vector<1x128xf32> to vector<8x128xf32>
    %11 = arith.addf %9, %10 : vector<8x128xf32>
    %c9_i32 = arith.constant 9 : i32
    %12 = arith.cmpi ne, %arg0, %c9_i32 : i32
    %13 = arith.extui %12 : i1 to i32
    %c0_i32_8 = arith.constant 0 : i32
    %14 = arith.cmpi ne, %13, %c0_i32_8 : i32
    scf.if %14 {
      %cst_11 = arith.constant 0.000000e+00 : f32
      %18 = vector.broadcast %cst_11 : f32 to vector<8x128xf32>
      %19 = arith.maximumf %11, %18 : vector<8x128xf32>
      %cst_12 = arith.constant dense<0.000000e+00> : vector<128xf32>
      %20 = vector.multi_reduction <add>, %19, %cst_12 [0] : vector<8x128xf32> to vector<128xf32>
      %21 = vector.shape_cast %20 : vector<128xf32> to vector<1x128xf32>
      %22 = arith.mulf %19, %19 : vector<8x128xf32>
      %cst_13 = arith.constant dense<0.000000e+00> : vector<128xf32>
      %23 = vector.multi_reduction <add>, %22, %cst_13 [0] : vector<8x128xf32> to vector<128xf32>
      %24 = vector.shape_cast %23 : vector<128xf32> to vector<1x128xf32>
      %cst_14 = arith.constant 1.250000e-01 : f32
      %25 = vector.broadcast %cst_14 : f32 to vector<1x128xf32>
      %26 = arith.mulf %21, %25 : vector<1x128xf32>
      %cst_15 = arith.constant 1.250000e-01 : f32
      %27 = vector.broadcast %cst_15 : f32 to vector<1x128xf32>
      %28 = arith.mulf %24, %27 : vector<1x128xf32>
      %29 = arith.mulf %26, %26 : vector<1x128xf32>
      %30 = arith.subf %28, %29 : vector<1x128xf32>
      %cst_16 = arith.constant 0.000000e+00 : f32
      %31 = vector.broadcast %cst_16 : f32 to vector<1x128xf32>
      %32 = arith.maximumf %30, %31 : vector<1x128xf32>
      %33 = vector.broadcast %26 : vector<1x128xf32> to vector<8x128xf32>
      %34 = arith.subf %19, %33 : vector<8x128xf32>
      %cst_17 = arith.constant 9.99999974E-6 : f32
      %35 = vector.broadcast %cst_17 : f32 to vector<1x128xf32>
      %36 = arith.addf %32, %35 : vector<1x128xf32>
      %37 = math.rsqrt %36 : vector<1x128xf32>
      %38 = vector.broadcast %37 : vector<1x128xf32> to vector<8x128xf32>
      %39 = arith.mulf %34, %38 : vector<8x128xf32>
      %c0_18 = arith.constant 0 : index
      %c0_19 = arith.constant 0 : index
      %c0_20 = arith.constant 0 : index
      %40 = vector.load %arg4[%c0_18, %c0_19, %c0_20] : memref<1x1x128xf32, #tpu.memory_space<vmem>>, vector<1x1x128xf32>
      %41 = vector.shape_cast %40 : vector<1x1x128xf32> to vector<1x128xf32>
      %42 = vector.broadcast %41 : vector<1x128xf32> to vector<8x128xf32>
      %43 = arith.mulf %39, %42 : vector<8x128xf32>
      %c0_21 = arith.constant 0 : index
      %c0_22 = arith.constant 0 : index
      %c0_23 = arith.constant 0 : index
      %44 = vector.load %arg5[%c0_21, %c0_22, %c0_23] : memref<1x1x128xf32, #tpu.memory_space<vmem>>, vector<1x1x128xf32>
      %45 = vector.shape_cast %44 : vector<1x1x128xf32> to vector<1x128xf32>
      %46 = vector.broadcast %45 : vector<1x128xf32> to vector<8x128xf32>
      %47 = arith.addf %43, %46 : vector<8x128xf32>
      %c0_24 = arith.constant 0 : index
      %c0_25 = arith.constant 0 : index
      %48 = vector.load %arg7[%c0_24, %c0_25] : memref<8x128xf32, #tpu.memory_space<vmem>>, vector<8x128xf32>
      tpu.vector_store %arg7[%c0_24, %c0_25], %47 {strides = array<i32>} : memref<8x128xf32, #tpu.memory_space<vmem>>, vector<8x128xf32>,
    } else {
    }
    %c9_i32_9 = arith.constant 9 : i32
    %15 = arith.cmpi eq, %arg0, %c9_i32_9 : i32
    %16 = arith.extui %15 : i1 to i32
    %c0_i32_10 = arith.constant 0 : i32
    %17 = arith.cmpi ne, %16, %c0_i32_10 : i32
    scf.if %17 {
      %c0_11 = arith.constant 0 : index
      %c0_12 = arith.constant 0 : index
      %18 = vector.load %arg6[%c0_11, %c0_12] : memref<8x128xf32, #tpu.memory_space<vmem>>, vector<8x128xf32>
      tpu.vector_store %arg6[%c0_11, %c0_12], %11 {strides = array<i32>} : memref<8x128xf32, #tpu.memory_space<vmem>>, vector<8x128xf32>,
    } else {
    }
    return
  }
  func.func @transform_0(%arg0: i32) -> (i32, i32) {
    %c0_i32 = arith.constant 0 : i32
    %c0_i32_0 = arith.constant 0 : i32
    %c0_i32_1 = arith.constant 0 : i32
    return %c0_i32, %c0_i32_0 : i32, i32
  }
  func.func @transform_1(%arg0: i32) -> (i32, i32, i32) {
    %c0_i32 = arith.constant 0 : i32
    %c0_i32_0 = arith.constant 0 : i32
    %c0_i32_1 = arith.constant 0 : i32
    return %arg0, %c0_i32, %c0_i32_0 : i32, i32, i32
  }
  func.func @transform_2(%arg0: i32) -> (i32, i32, i32) {
    %c0_i32 = arith.constant 0 : i32
    %c0_i32_0 = arith.constant 0 : i32
    %c0_i32_1 = arith.constant 0 : i32
    return %arg0, %c0_i32, %c0_i32_0 : i32, i32, i32
  }
  func.func @transform_3(%arg0: i32) -> (i32, i32, i32) {
    %c0_i32 = arith.constant 0 : i32
    %c0_i32_0 = arith.constant 0 : i32
    %c0_i32_1 = arith.constant 0 : i32
    return %arg0, %c0_i32, %c0_i32_0 : i32, i32, i32
  }
  func.func @transform_4(%arg0: i32) -> (i32, i32, i32) {
    %c0_i32 = arith.constant 0 : i32
    %c0_i32_0 = arith.constant 0 : i32
    %c0_i32_1 = arith.constant 0 : i32
    return %arg0, %c0_i32, %c0_i32_0 : i32, i32, i32
  }
  func.func @transform_5(%arg0: i32) -> (i32, i32) {
    %c0_i32 = arith.constant 0 : i32
    %c0_i32_0 = arith.constant 0 : i32
    %c0_i32_1 = arith.constant 0 : i32
    return %c0_i32, %c0_i32_0 : i32, i32
  }
}

</mosaic_0001>

<llo_original>
// kernel: tpu_custom_call.1
$region0: #{tpu_custom_call.1}
  #allocation0 [shape = 'u32[]', space=smem, size = 0x4, offset = 0x4, fixed_abs, tag = 'smem constant byte address 0x4 - core index']
  #allocation1 [shape = 'u32[144,128]{1,0:T(1,128)}', space=vmem, size = 0x12000, scoped, tag = 'internal scratch']
  #allocation2 [shape = 'f32[8,128]{1,0:T(8,128)}', space=vmem, size = 0x1000, scoped, tag = 'scratch operand']
  %s0 = inlined_call_operand.hbm [shape: f32[8,128], index: 0, kind: input, shape index: {}]
  %s1 = inlined_call_operand.hbm [shape: bf16[10,128,128], index: 1, kind: input, shape index: {}]
  %s2 = inlined_call_operand.hbm [shape: f32[10,1,128], index: 2, kind: input, shape index: {}]
  %s3 = inlined_call_operand.hbm [shape: f32[10,1,128], index: 3, kind: input, shape index: {}]
  %s4 = inlined_call_operand.hbm [shape: f32[10,1,128], index: 4, kind: input, shape index: {}]
  %s5 = inlined_call_operand.hbm [shape: f32[8,128], index: 5, kind: output, shape index: {}]
  %s6 = sld [smem:[#allocation0]]
  $region85: #{tpu_custom_call.1} parent=0
    _
  %s8 = ssub.s32 1, %s6
  %s9 = scalar_select 0, %s8, %s6
  $region1: #{tpu_custom_call.1} parent=0
    #allocation3 [shape = 'u8[4096]{0}', space=vmem, size = 0x1000, scoped, tag = 'input window, operand 0, single buffered']
    #allocation4 [shape = 's32[2]{0}', space=sflag, size = 0x8, scoped, tag = 'scoped memory for tpu_custom_call.1']
    #allocation5 [shape = 's32[2]{0}', space=sflag, size = 0x8, scoped, tag = 'scoped memory for tpu_custom_call.1']
    #allocation6 [shape = 'u8[65536]{0}', space=vmem, size = 0x10000, scoped, tag = 'input window, operand 1']
    #allocation7 [shape = 's32[2]{0}', space=sflag, size = 0x8, scoped, tag = 'scoped memory for tpu_custom_call.1']
    #allocation8 [shape = 'u8[1024]{0}', space=vmem, size = 0x400, scoped, tag = 'input window, operand 2']
    #allocation9 [shape = 'u8[1024]{0}', space=vmem, size = 0x400, scoped, tag = 'input window, operand 3']
    #allocation10 [shape = 's32[2]{0}', space=sflag, size = 0x8, scoped, tag = 'scoped memory for tpu_custom_call.1']
    #allocation11 [shape = 'u8[1024]{0}', space=vmem, size = 0x400, scoped, tag = 'input window, operand 4']
    #allocation12 [shape = 'u8[4096]{0}', space=vmem, size = 0x1000, scoped, tag = 'output window, operand 0, single buffered']
    %10 = vsyncpa [#allocation4], 0
    %11 = vsyncpa [#allocation7], 0
    %s12 = scalar_lea.sflag [#allocation7], 1
    %13 = vsyncpa %s12, 0
    %14 = vsyncpa [#allocation10], 0
    %s15 = scalar_lea.sflag [#allocation10], 1
    %16 = vsyncpa %s15, 0
    %17 = vsyncpa [#allocation5], 0
    loop: start=0, step=1, limit=12
    $region2: #{tpu_custom_call.1} parent=1 // loop_pre_header
      _
    $region3: #{tpu_custom_call.1} parent=1 // loop_header
      %s19 = sphi 0, %s23
      %p20 = scmp.ge.s32.totalorder %s19, 12
      %s27 = sphi 0, %s27
      %s29 = sphi 0, %s27
      %s30 = sphi 0, %s29
      %s44 = sphi 0, %s30
      %s50 = sphi 0, %s52
      %s53 = sphi 0, %s50
      %s54 = sphi 0, %s53
      %s70 = sphi 0, %s54
      %s76 = sphi 0, %s78
      %s79 = sphi 0, %s76
      %s80 = sphi 0, %s79
      %s96 = sphi 0, %s80
      %s102 = sphi 0, %s104
      %s105 = sphi 0, %s102
      %s106 = sphi 0, %s105
      %s122 = sphi 0, %s106
      %s128 = sphi 0, %s130
      %s131 = sphi 0, %s128
      %s132 = sphi 0, %s131
      %s148 = sphi 0, %s132
      %s152 = sphi 0, %s152
      %s154 = sphi 0, %s152
      %s155 = sphi 0, %s154
      %s169 = sphi 0, %s155
    $region4: #{tpu_custom_call.1} parent=1 // loop_header_branch
      %22 = sbr.rel (%p20) target = $region8
    $region5: #{tpu_custom_call.1} parent=1 // loop_body
      %s24 = ssub.s32 %s19, 1
      %s25 = ssub.s32 %s19, 2
      %s26 = sadd.s32 %s19, 1
      %s28 = sadd.s32 %s27, 1
      %p31 = scmp.eq.s32.totalorder %s19, 9
      %p32 = scmp.ne.s32.totalorder %s27, %s29
      %p33 = scmp.eq.s32.totalorder %s19, 0
      %p34 = por %p32, %p33
      %p35 = scmp.ne.s32.totalorder %s27, %s29
      %p36 = scmp.eq.s32.totalorder %s24, 9
      %p37 = por %p35, %p36
      %p38 = scmp.ne.s32.totalorder %s29, %s30
      %p39 = scmp.eq.s32.totalorder %s24, 0
      %p40 = por %p38, %p39
      %p41 = scmp.ne.s32.totalorder %s29, %s30
      %p42 = scmp.eq.s32.totalorder %s25, 9
      %p43 = por %p41, %p42
      %p45 = scmp.ne.s32.totalorder %s30, %s44
      %p46 = scmp.eq.s32.totalorder %s25, 0
      %p47 = por %p45, %p46
      %s48 = ssub.s32 %s19, %s26
      %p49 = scmp.eq.s32.totalorder %s48, 0
      %s51 = sadd.s32 %s50, 1
      %s52 = scalar_select %p49, %s50, %s51
      %p55 = pneg %p49
      %p56 = scmp.eq.s32.totalorder %s19, 9
      %p57 = por %p55, %p56
      %p58 = scmp.ne.s32.totalorder %s50, %s53
      %p59 = scmp.eq.s32.totalorder %s19, 0
      %p60 = por %p58, %p59
      %p61 = scmp.ne.s32.totalorder %s50, %s53
      %p62 = scmp.eq.s32.totalorder %s24, 9
      %p63 = por %p61, %p62
      %p64 = scmp.ne.s32.totalorder %s53, %s54
      %p65 = scmp.eq.s32.totalorder %s24, 0
      %p66 = por %p64, %p65
      %p67 = scmp.ne.s32.totalorder %s53, %s54
      %p68 = scmp.eq.s32.totalorder %s25, 9
      %p69 = por %p67, %p68
      %p71 = scmp.ne.s32.totalorder %s54, %s70
      %p72 = scmp.eq.s32.totalorder %s25, 0
      %p73 = por %p71, %p72
      %s74 = ssub.s32 %s19, %s26
      %p75 = scmp.eq.s32.totalorder %s74, 0
      %s77 = sadd.s32 %s76, 1
      %s78 = scalar_select %p75, %s76, %s77
      %p81 = pneg %p75
      %p82 = scmp.eq.s32.totalorder %s19, 9
      %p83 = por %p81, %p82
      %p84 = scmp.ne.s32.totalorder %s76, %s79
      %p85 = scmp.eq.s32.totalorder %s19, 0
      %p86 = por %p84, %p85
      %p87 = scmp.ne.s32.totalorder %s76, %s79
      %p88 = scmp.eq.s32.totalorder %s24, 9
      %p89 = por %p87, %p88
      %p90 = scmp.ne.s32.totalorder %s79, %s80
      %p91 = scmp.eq.s32.totalorder %s24, 0
      %p92 = por %p90, %p91
      %p93 = scmp.ne.s32.totalorder %s79, %s80
      %p94 = scmp.eq.s32.totalorder %s25, 9
      %p95 = por %p93, %p94
      %p97 = scmp.ne.s32.totalorder %s80, %s96
      %p98 = scmp.eq.s32.totalorder %s25, 0
      %p99 = por %p97, %p98
      %s100 = ssub.s32 %s19, %s26
      %p101 = scmp.eq.s32.totalorder %s100, 0
      %s103 = sadd.s32 %s102, 1
      %s104 = scalar_select %p101, %s102, %s103
      %p107 = pneg %p101
      %p108 = scmp.eq.s32.totalorder %s19, 9
      %p109 = por %p107, %p108
      %p110 = scmp.ne.s32.totalorder %s102, %s105
      %p111 = scmp.eq.s32.totalorder %s19, 0
      %p112 = por %p110, %p111
      %p113 = scmp.ne.s32.totalorder %s102, %s105
      %p114 = scmp.eq.s32.totalorder %s24, 9
      %p115 = por %p113, %p114
      %p116 = scmp.ne.s32.totalorder %s105, %s106
      %p117 = scmp.eq.s32.totalorder %s24, 0
      %p118 = por %p116, %p117
      %p119 = scmp.ne.s32.totalorder %s105, %s106
      %p120 = scmp.eq.s32.totalorder %s25, 9
      %p121 = por %p119, %p120
      %p123 = scmp.ne.s32.totalorder %s106, %s122
      %p124 = scmp.eq.s32.totalorder %s25, 0
      %p125 = por %p123, %p124
      %s126 = ssub.s32 %s19, %s26
      %p127 = scmp.eq.s32.totalorder %s126, 0
      %s129 = sadd.s32 %s128, 1
      %s130 = scalar_select %p127, %s128, %s129
      %p133 = pneg %p127
      %p134 = scmp.eq.s32.totalorder %s19, 9
      %p135 = por %p133, %p134
      %p136 = scmp.ne.s32.totalorder %s128, %s131
      %p137 = scmp.eq.s32.totalorder %s19, 0
      %p138 = por %p136, %p137
      %p139 = scmp.ne.s32.totalorder %s128, %s131
      %p140 = scmp.eq.s32.totalorder %s24, 9
      %p141 = por %p139, %p140
      %p142 = scmp.ne.s32.totalorder %s131, %s132
      %p143 = scmp.eq.s32.totalorder %s24, 0
      %p144 = por %p142, %p143
      %p145 = scmp.ne.s32.totalorder %s131, %s132
      %p146 = scmp.eq.s32.totalorder %s25, 9
      %p147 = por %p145, %p146
      %p149 = scmp.ne.s32.totalorder %s132, %s148
      %p150 = scmp.eq.s32.totalorder %s25, 0
      %p151 = por %p149, %p150
      %s153 = sadd.s32 %s152, 1
      %p156 = scmp.eq.s32.totalorder %s19, 9
      %p157 = scmp.ne.s32.totalorder %s152, %s154
      %p158 = scmp.eq.s32.totalorder %s19, 0
      %p159 = por %p157, %p158
      %p160 = scmp.ne.s32.totalorder %s152, %s154
      %p161 = scmp.eq.s32.totalorder %s24, 9
      %p162 = por %p160, %p161
      %p163 = scmp.ne.s32.totalorder %s154, %s155
      %p164 = scmp.eq.s32.totalorder %s24, 0
      %p165 = por %p163, %p164
      %p166 = scmp.ne.s32.totalorder %s154, %s155
      %p167 = scmp.eq.s32.totalorder %s25, 9
      %p168 = por %p166, %p167
      %p170 = scmp.ne.s32.totalorder %s155, %s169
      %p171 = scmp.eq.s32.totalorder %s25, 0
      %p172 = por %p170, %p171
      %p173 = scmp.le.s32.totalorder 1, %s19
      %p174 = scmp.lt.s32.totalorder %s19, 11
      %p175 = pnand %p173, %p174
      %p176 = pneg %p175
      // Predicated region
      $region9: #{tpu_custom_call.1} parent=5 // pred_check
        _
      $region10: #{tpu_custom_call.1} parent=5 // pred_check_branch
        %178 = sbr.rel (%p175) target = $region12
      $region11: #{tpu_custom_call.1} parent=5 // pred_region
        %s179 = ssub.s32 %s19, 1
        // Predicated region
        $region13: #{tpu_custom_call.1} parent=11 // pred_check
          %p180 = pneg %p40
        $region14: #{tpu_custom_call.1} parent=11 // pred_check_branch
          %182 = sbr.rel (%p180) target = $region16
        $region15: #{tpu_custom_call.1} parent=11 // pred_region
          %s184 = ssub.s32 128, 128
          %185 = vsyncadd [#allocation4], %s184
          %s187 = sshll.u32 [#allocation3], 4
          %s188 = int_to_ptr.vmem [resolvable:$true] %s187
          %190 = dma.hbm_to_vmem [thread:$0]  %s0, 128, %s188, [#allocation4]
        $region16: #{tpu_custom_call.1} parent=11 // pred_fallthru
          _
      $region12: #{tpu_custom_call.1} parent=5 // pred_fallthru
        _
      %p191 = scmp.lt.s32.totalorder %s19, 10
      // Predicated region
      $region17: #{tpu_custom_call.1} parent=5 // pred_check
        %p192 = pneg %p191
      $region18: #{tpu_custom_call.1} parent=5 // pred_check_branch
        %194 = sbr.rel (%p192) target = $region20
      $region19: #{tpu_custom_call.1} parent=5 // pred_region
        // Predicated region
        $region21: #{tpu_custom_call.1} parent=19 // pred_check
          %p195 = pneg %p60
        $region22: #{tpu_custom_call.1} parent=19 // pred_check_branch
          %197 = sbr.rel (%p195) target = $region24
        $region23: #{tpu_custom_call.1} parent=19 // pred_region
          %s198 = sand.u32 %s19, 1
          %s199 = scalar_lea.sflag [#allocation7], %s198
          %s200 = sand.u32 %s50, 1
          %s201 = smul.addr %s200, 64
          %s202 = scalar_lea.vmem [#allocation6], %s201
          %s204 = ssub.s32 1024, 1024
          %205 = vsyncadd %s199, %s204
          %s206 = smul.addr %s19, 16
          %s207 = smul.addr %s206, 64
          %s208 = scalar_lea.hbm %s1, %s207
          %s209 = sshll.u32 %s202, 4
          %s210 = int_to_ptr.vmem [resolvable:$true] %s209
          %215 = dma.hbm_to_vmem [thread:$0]  %s208, 1024, %s210, %s199, 64, 64, 4
        $region24: #{tpu_custom_call.1} parent=19 // pred_fallthru
          _
        // Predicated region
        $region25: #{tpu_custom_call.1} parent=19 // pred_check
          %p216 = pneg %p86
        $region26: #{tpu_custom_call.1} parent=19 // pred_check_branch
          %218 = sbr.rel (%p216) target = $region28
        $region27: #{tpu_custom_call.1} parent=19 // pred_region
          %s219 = sand.u32 %s19, 1
          %s220 = scalar_lea.sflag [#allocation7], %s219
          %s221 = sand.u32 %s76, 1
          %s222 = scalar_lea.vmem [#allocation8], %s221
          %s224 = ssub.s32 16, 16
          %225 = vsyncadd %s220, %s224
          %s226 = smul.addr %s19, 16
          %s227 = scalar_lea.hbm %s2, %s226
          %s229 = sshll.u32 %s222, 4
          %s230 = int_to_ptr.vmem [resolvable:$true] %s229
          %232 = dma.hbm_to_vmem [thread:$0]  %s227, 16, %s230, %s220
        $region28: #{tpu_custom_call.1} parent=19 // pred_fallthru
          _
        // Predicated region
        $region29: #{tpu_custom_call.1} parent=19 // pred_check
          %p233 = pneg %p112
        $region30: #{tpu_custom_call.1} parent=19 // pred_check_branch
          %235 = sbr.rel (%p233) target = $region32
        $region31: #{tpu_custom_call.1} parent=19 // pred_region
          %s236 = sand.u32 %s19, 1
          %s237 = scalar_lea.sflag [#allocation10], %s236
          %s238 = sand.u32 %s102, 1
          %s239 = scalar_lea.vmem [#allocation9], %s238
          %s241 = ssub.s32 16, 16
          %242 = vsyncadd %s237, %s241
          %s243 = smul.addr %s19, 16
          %s244 = scalar_lea.hbm %s3, %s243
          %s246 = sshll.u32 %s239, 4
          %s247 = int_to_ptr.vmem [resolvable:$true] %s246
          %249 = dma.hbm_to_vmem [thread:$0]  %s244, 16, %s247, %s237
        $region32: #{tpu_custom_call.1} parent=19 // pred_fallthru
          _
        // Predicated region
        $region33: #{tpu_custom_call.1} parent=19 // pred_check
          %p250 = pneg %p138
        $region34: #{tpu_custom_call.1} parent=19 // pred_check_branch
          %252 = sbr.rel (%p250) target = $region36
        $region35: #{tpu_custom_call.1} parent=19 // pred_region
          %s253 = sand.u32 %s19, 1
          %s254 = scalar_lea.sflag [#allocation10], %s253
          %s255 = sand.u32 %s128, 1
          %s256 = scalar_lea.vmem [#allocation11], %s255
          %s258 = ssub.s32 16, 16
          %259 = vsyncadd %s254, %s258
          %s260 = smul.addr %s19, 16
          %s261 = scalar_lea.hbm %s4, %s260
          %s263 = sshll.u32 %s256, 4
          %s264 = int_to_ptr.vmem [resolvable:$true] %s263
          %266 = dma.hbm_to_vmem [thread:$0]  %s261, 16, %s264, %s254
        $region36: #{tpu_custom_call.1} parent=19 // pred_fallthru
          _
      $region20: #{tpu_custom_call.1} parent=5 // pred_fallthru
        _
      %p267 = scmp.le.s32.totalorder 1, %s19
      %p268 = scmp.lt.s32.totalorder %s19, 11
      %p269 = pnand %p267, %p268
      %p270 = pneg %p269
      // Predicated region
      $region37: #{tpu_custom_call.1} parent=5 // pred_check
        _
      $region38: #{tpu_custom_call.1} parent=5 // pred_check_branch
        %272 = sbr.rel (%p269) target = $region40
      $region39: #{tpu_custom_call.1} parent=5 // pred_region
        %s273 = ssub.s32 %s19, 1
        // Predicated region
        $region41: #{tpu_custom_call.1} parent=39 // pred_check
          %p274 = pneg %p40
        $region42: #{tpu_custom_call.1} parent=39 // pred_check_branch
          %276 = sbr.rel (%p274) target = $region44
        $region43: #{tpu_custom_call.1} parent=39 // pred_region
          %277 = dma.done [#allocation4], 128
        $region44: #{tpu_custom_call.1} parent=39 // pred_fallthru
          _
        %s278 = sand.u32 %s24, 1
        %s279 = scalar_lea.sflag [#allocation7], %s278
        %s280 = sand.u32 %s53, 1
        %s281 = smul.addr %s280, 64
        %s282 = scalar_lea.vmem [#allocation6], %s281
        // Predicated region
        $region45: #{tpu_custom_call.1} parent=39 // pred_check
          %p283 = pneg %p66
        $region46: #{tpu_custom_call.1} parent=39 // pred_check_branch
          %285 = sbr.rel (%p283) target = $region48
        $region47: #{tpu_custom_call.1} parent=39 // pred_region
          %286 = dma.done %s279, 1024
        $region48: #{tpu_custom_call.1} parent=39 // pred_fallthru
          _
        %s287 = sand.u32 %s24, 1
        %s288 = scalar_lea.sflag [#allocation7], %s287
        %s289 = sand.u32 %s79, 1
        %s290 = scalar_lea.vmem [#allocation8], %s289
        // Predicated region
        $region49: #{tpu_custom_call.1} parent=39 // pred_check
          %p291 = pneg %p92
        $region50: #{tpu_custom_call.1} parent=39 // pred_check_branch
          %293 = sbr.rel (%p291) target = $region52
        $region51: #{tpu_custom_call.1} parent=39 // pred_region
          %294 = dma.done %s288, 16
        $region52: #{tpu_custom_call.1} parent=39 // pred_fallthru
          _
        %s295 = sand.u32 %s24, 1
        %s296 = scalar_lea.sflag [#allocation10], %s295
        %s297 = sand.u32 %s105, 1
        %s298 = scalar_lea.vmem [#allocation9], %s297
        // Predicated region
        $region53: #{tpu_custom_call.1} parent=39 // pred_check
          %p299 = pneg %p118
        $region54: #{tpu_custom_call.1} parent=39 // pred_check_branch
          %301 = sbr.rel (%p299) target = $region56
        $region55: #{tpu_custom_call.1} parent=39 // pred_region
          %302 = dma.done %s296, 16
        $region56: #{tpu_custom_call.1} parent=39 // pred_fallthru
          _
        %s303 = sand.u32 %s24, 1
        %s304 = scalar_lea.sflag [#allocation10], %s303
        %s305 = sand.u32 %s131, 1
        %s306 = scalar_lea.vmem [#allocation11], %s305
        // Predicated region
        $region57: #{tpu_custom_call.1} parent=39 // pred_check
          %p307 = pneg %p144
        $region58: #{tpu_custom_call.1} parent=39 // pred_check_branch
          %309 = sbr.rel (%p307) target = $region60
        $region59: #{tpu_custom_call.1} parent=39 // pred_region
          %310 = dma.done %s304, 16
        $region60: #{tpu_custom_call.1} parent=39 // pred_fallthru
          _
        %p311 = pneg %p40
        %p312 = pneg %p37
        %s313 = sand.u32 %s24, 1
        %s314 = scalar_lea.sflag [#allocation7], %s313
        %s315 = sand.u32 %s53, 1
        %s316 = smul.addr %s315, 64
        %s317 = scalar_lea.vmem [#allocation6], %s316
        %p318 = pneg %p66
        %p319 = pneg %p63
        %s320 = sand.u32 %s24, 1
        %s321 = scalar_lea.sflag [#allocation7], %s320
        %s322 = sand.u32 %s79, 1
        %s323 = scalar_lea.vmem [#allocation8], %s322
        %p324 = pneg %p92
        %p325 = pneg %p89
        %s326 = sand.u32 %s24, 1
        %s327 = scalar_lea.sflag [#allocation10], %s326
        %s328 = sand.u32 %s105, 1
        %s329 = scalar_lea.vmem [#allocation9], %s328
        %p330 = pneg %p118
        %p331 = pneg %p115
        %s332 = sand.u32 %s24, 1
        %s333 = scalar_lea.sflag [#allocation10], %s332
        %s334 = sand.u32 %s131, 1
        %s335 = scalar_lea.vmem [#allocation11], %s334
        %p336 = pneg %p144
        %p337 = pneg %p141
        %p338 = pneg %p165
        %p339 = pneg %p162
        %p341 = scmp.eq.s32.totalorder %s24, 0
        // Predicated region
        $region61: #{tpu_custom_call.1} parent=39 // pred_check
          %p342 = pneg %p341
        $region62: #{tpu_custom_call.1} parent=39 // pred_check_branch
          %344 = sbr.rel (%p342) target = $region64
        $region63: #{tpu_custom_call.1} parent=39 // pred_region
          %v345 = vld [vmem:[#allocation3] sm:$0xff]
          %346 = vst [vmem:[#allocation2] sm:$0xff] %v345
        $region64: #{tpu_custom_call.1} parent=39 // pred_fallthru
          _
        %v347 = vld [vmem:[#allocation2] sm:$0xff]
        %v348 = vld [vmem:[%s282] sm:$0xf]
        %v349 = vld [vmem:[%s282 + $0x4] sm:$0xf]
        %v350 = vld [vmem:[%s282 + $0x8] sm:$0xf]
        %v351 = vld [vmem:[%s282 + $0xc] sm:$0xf]
        %v352 = vld [vmem:[%s282 + $0x10] sm:$0xf]
        %v353 = vld [vmem:[%s282 + $0x14] sm:$0xf]
        %v354 = vld [vmem:[%s282 + $0x18] sm:$0xf]
        %v355 = vld [vmem:[%s282 + $0x1c] sm:$0xf]
        %v356 = vld [vmem:[%s282 + $0x20] sm:$0xf]
        %v357 = vld [vmem:[%s282 + $0x24] sm:$0xf]
        %v358 = vld [vmem:[%s282 + $0x28] sm:$0xf]
        %v359 = vld [vmem:[%s282 + $0x2c] sm:$0xf]
        %v360 = vld [vmem:[%s282 + $0x30] sm:$0xf]
        %v361 = vld [vmem:[%s282 + $0x34] sm:$0xf]
        %v362 = vld [vmem:[%s282 + $0x38] sm:$0xf]
        %v363 = vld [vmem:[%s282 + $0x3c] sm:$0xf]
        %v364 = vld [vmem:[%s290] sm:$0x1]
        %v365 = vpack.c.bf16 %v347, %v347
        %v367 = vlaneseq
        %v368 = vshrl.u32 %v367, 7
        %v369 = vsub.s32 0, %v368
        %v370 = vrot.slane %v364, %v369
        %v388 = vunpack.c.l.b16 %v348
        %v389 = vunpack.c.l.b16 %v349
        %v390 = vunpack.c.l.b16 %v350
        %v391 = vunpack.c.l.b16 %v351
        %v392 = vunpack.c.l.b16 %v352
        %v393 = vunpack.c.l.b16 %v353
        %v394 = vunpack.c.l.b16 %v354
        %v395 = vunpack.c.l.b16 %v355
        %v396 = vunpack.c.l.b16 %v356
        %v397 = vunpack.c.l.b16 %v357
        %v398 = vunpack.c.l.b16 %v358
        %v399 = vunpack.c.l.b16 %v359
        %v400 = vunpack.c.l.b16 %v360
        %v401 = vunpack.c.l.b16 %v361
        %v402 = vunpack.c.l.b16 %v362
        %v403 = vunpack.c.l.b16 %v363
        %v404 = vpack.c.b16 %v389, %v388
        %v405 = vpack.c.b16 %v391, %v390
        %v406 = vpack.c.b16 %v393, %v392
        %v407 = vpack.c.b16 %v395, %v394
        %v408 = vpack.c.b16 %v397, %v396
        %v409 = vpack.c.b16 %v399, %v398
        %v410 = vpack.c.b16 %v401, %v400
        %v411 = vpack.c.b16 %v403, %v402
        %420 = vmatprep.subr.bf16.mxu0 0
        %421 = vmatpush1.bf16.msra.mxu0 %v411
        %422 = vmatprep.subr.bf16.mxu0 0
        %423 = vmatpush1.bf16.msra.mxu0 %v410
        %424 = vmatprep.subr.bf16.mxu0 0
        %425 = vmatpush1.bf16.msra.mxu0 %v409
        %426 = vmatprep.subr.bf16.mxu0 0
        %427 = vmatpush1.bf16.msra.mxu0 %v408
        %428 = vmatprep.subr.bf16.mxu0 0
        %429 = vmatpush1.bf16.msra.mxu0 %v407
        %430 = vmatprep.subr.bf16.mxu0 0
        %431 = vmatpush1.bf16.msra.mxu0 %v406
        %432 = vmatprep.subr.bf16.mxu0 0
        %433 = vmatpush1.bf16.msra.mxu0 %v405
        %434 = vmatprep.subr.bf16.mxu0 0
        %435 = vmatpush1.bf16.msra.mxu0 %v404
        %436 = vmatprep.subr.bf16.mxu0 0
        %437 = vmatpush2.bf16.msra.mxu0 0
        %438 = vmatprep.subr.bf16.mxu0 0
        %439 = vmatpush2.bf16.msra.mxu0 0
        %440 = vmatprep.subr.bf16.mxu0 0
        %441 = vmatpush2.bf16.msra.mxu0 0
        %442 = vmatprep.subr.bf16.mxu0 0
        %443 = vmatpush2.bf16.msra.mxu0 0
        %444 = vmatprep.subr.bf16.mxu0 0
        %445 = vmatpush2.bf16.msra.mxu0 0
        %446 = vmatprep.subr.bf16.mxu0 0
        %447 = vmatpush2.bf16.msra.mxu0 0
        %448 = vmatprep.subr.bf16.mxu0 0
        %449 = vmatpush2.bf16.msra.mxu0 0
        %450 = vmatprep.subr.bf16.mxu0 0
        %451 = vmatpush2.bf16.msra.mxu0 0
        %452 = vmatprep.mubr.bf16.mxu0 0
        %453 = vmatmul.mubr.bf16.gmra.mxu0 %v365
        %v454 = vpop.f32.mrf.mxu0
        %v455 = vadd.f32 %v370, %v454
        %v456 = vpop.f32.mrf.mxu0
        %v457 = vpop.f32.mrf.mxu0
        %v458 = vpop.f32.mrf.mxu0
        %459 = vdwg.mxu0
        %p460 = scmp.ne.s32.totalorder %s24, 9
        // Predicated region
        $region65: #{tpu_custom_call.1} parent=39 // pred_check
          %p461 = pneg %p460
        $region66: #{tpu_custom_call.1} parent=39 // pred_check_branch
          %463 = sbr.rel (%p461) target = $region68
        $region67: #{tpu_custom_call.1} parent=39 // pred_region
          %v464 = vmax.f32 %v455, 0.0
          %v465 = vrot.slane %v464, 4
          %v466 = vadd.f32 %v464, %v465
          %v467 = vrot.slane %v466, 2
          %v468 = vadd.f32 %v466, %v467
          %v469 = vrot.slane %v468, 1
          %v470 = vadd.f32 %v468, %v469
          %v471 = vmul.f32 %v464, %v464
          %v472 = vrot.slane %v471, 4
          %v473 = vadd.f32 %v471, %v472
          %v474 = vrot.slane %v473, 2
          %v475 = vadd.f32 %v473, %v474
          %v476 = vrot.slane %v475, 1
          %v477 = vadd.f32 %v475, %v476
          %v478 = vmul.f32 %v470, 0.125
          %v479 = vmul.f32 %v477, 0.125
          %v480 = vmul.f32 %v478, %v478
          %v481 = vsub.f32 %v479, %v480
          %v482 = vmax.f32 %v481, 0.0
          %v483 = vsub.f32 %v464, %v478
          %v484 = vadd.f32 %v482, 1e-05
          %v485 = vrsqrt.pop %v484
          %v486 = vmul.f32 %v483, %v485
          %v487 = vld [vmem:[%s298] sm:$0x1]
          %v489 = vlaneseq
          %v490 = vshrl.u32 %v489, 7
          %v491 = vsub.s32 0, %v490
          %v492 = vrot.slane %v487, %v491
          %v494 = vmul.f32 %v486, %v492
          %v495 = vld [vmem:[%s306] sm:$0x1]
          %v497 = vlaneseq
          %v498 = vshrl.u32 %v497, 7
          %v499 = vsub.s32 0, %v498
          %v500 = vrot.slane %v495, %v499
          %v502 = vadd.f32 %v494, %v500
          %503 = vst [vmem:[#allocation2] sm:$0xff] %v502
        $region68: #{tpu_custom_call.1} parent=39 // pred_fallthru
          _
        %p504 = scmp.eq.s32.totalorder %s24, 9
        // Predicated region
        $region69: #{tpu_custom_call.1} parent=39 // pred_check
          %p505 = pneg %p504
        $region70: #{tpu_custom_call.1} parent=39 // pred_check_branch
          %507 = sbr.rel (%p505) target = $region72
        $region71: #{tpu_custom_call.1} parent=39 // pred_region
          %508 = vst [vmem:[#allocation12] sm:$0xff] %v455
        $region72: #{tpu_custom_call.1} parent=39 // pred_fallthru
          _
        // Predicated region
        $region73: #{tpu_custom_call.1} parent=39 // pred_check
          %p509 = pneg %p162
        $region74: #{tpu_custom_call.1} parent=39 // pred_check_branch
          %511 = sbr.rel (%p509) target = $region76
        $region75: #{tpu_custom_call.1} parent=39 // pred_region
          %s513 = ssub.s32 128, 128
          %514 = vsyncadd [#allocation5], %s513
          %s516 = sshll.u32 [#allocation12], 4
          %s517 = int_to_ptr.vmem [resolvable:$true] %s516
          %519 = dma.vmem_to_hbm [thread:$0]  %s517, 128, %s5, [#allocation5]
        $region76: #{tpu_custom_call.1} parent=39 // pred_fallthru
          _
        // Predicated region
        $region77: #{tpu_custom_call.1} parent=39 // pred_check
          %p520 = pneg %p162
        $region78: #{tpu_custom_call.1} parent=39 // pred_check_branch
          %522 = sbr.rel (%p520) target = $region80
        $region79: #{tpu_custom_call.1} parent=39 // pred_region
          %523 = dma.done [#allocation5], 128
        $region80: #{tpu_custom_call.1} parent=39 // pred_fallthru
          _
      $region40: #{tpu_custom_call.1} parent=5 // pred_fallthru
        _
      %p524 = scmp.le.s32.totalorder 2, %s19
      // Predicated region
      $region81: #{tpu_custom_call.1} parent=5 // pred_check
        %p525 = pneg %p524
      $region82: #{tpu_custom_call.1} parent=5 // pred_check_branch
        %527 = sbr.rel (%p525) target = $region84
      $region83: #{tpu_custom_call.1} parent=5 // pred_region
        %s528 = ssub.s32 %s19, 2
      $region84: #{tpu_custom_call.1} parent=5 // pred_fallthru
        _
    $region6: #{tpu_custom_call.1} parent=1 // loop_footer
      %s23 = sadd.s32 1, %s19
    $region7: #{tpu_custom_call.1} parent=1 // loop_footer_branch
      %18 = sbr.rel target = $region3
    $region8: #{tpu_custom_call.1} parent=1 // loop_exit
      _
    %529 = vsyncpa [#allocation4], 1
    %s530 = scalar_lea.sflag [#allocation4], 1
    %531 = vsyncpa %s530, 1
    %532 = vsyncpa [#allocation7], 1
    %s533 = scalar_lea.sflag [#allocation7], 1
    %534 = vsyncpa %s533, 1
    %535 = vsyncpa [#allocation10], 1
    %s536 = scalar_lea.sflag [#allocation10], 1
    %537 = vsyncpa %s536, 1
    %538 = vsyncpa [#allocation5], 1
    %s539 = scalar_lea.sflag [#allocation5], 1
    %540 = vsyncpa %s539, 1

</llo_original>
